<compile_context>
chip_gen: v5e
topology: v5e:2x2
jax: 0.10.0
libtpu: 0.0.40
codegen_flags: <defaults>
</compile_context>

<pallas_src>
import functools

import jax
import jax.numpy as jnp
from jax.experimental import pallas as pl
from jax.experimental.pallas import tpu as pltpu

LANE = 128
BF16 = jnp.bfloat16


def _round_up(x, m):
    return (x + m - 1) // m * m


def _vmem_capacity_bytes():
    # Per-TensorCore VMEM: 128 MiB (v5e/v6e), 64 MiB (v7x).
    try:
        info = pltpu.get_tpu_info()
        cap = int(getattr(info, "vmem_capacity_bytes", 0) or 0)
        if cap > 0:
            return cap
    except Exception:
        pass
    return 64 * 1024 * 1024  # conservative fallback (v7x-sized)


def _scoped_vmem_limit():
    # ~96 MiB scoped limit on 128-MiB chips, ~48 MiB on 64-MiB chips.
    return int(min(_vmem_capacity_bytes() * 3 // 4, 100 * 1024 * 1024))


# ---------------------------------------------------------------------------
# Graph operands: padded int8 (A + I) counts + padded f32 D^{-1/2} vector,
# built once directly into the padded low-precision buffer.
# NOTE: per-pair edge multiplicity (incl. self loop) must stay <= 127 (int8).
# ---------------------------------------------------------------------------
def build_graph_operands(edge_index, num_nodes, np_pad):
    src, dst = edge_index
    a = jnp.zeros((np_pad, np_pad), jnp.int8)
    a = a.at[dst, src].add(1)                        # A[target, source]; dups sum
    loop = jnp.arange(num_nodes, dtype=src.dtype)
    a = a.at[loop, loop].add(1)                      # self loops (real nodes only)
    deg = jnp.zeros((np_pad,), jnp.float32).at[dst].add(1.0)
    deg = deg.at[loop].add(1.0)
    dinv = jnp.where(deg > 0.0, jax.lax.rsqrt(deg), 0.0)   # f32; 0 on padding
    return a, dinv.reshape(np_pad, 1)


# ---------------------------------------------------------------------------
# Kernel 1: fully fused two-layer GCN (whole arrays in VMEM, small graphs).
# ---------------------------------------------------------------------------
def _fused_kernel(a_ref, x_ref, dinv_ref, w1_ref, b1_ref, w2_ref, b2_ref, o_ref):
    a = a_ref[...].astype(BF16)                                      # [Np,Np]
    dinv = dinv_ref[...]                                             # [Np,1] f32
    xw = jnp.dot(x_ref[...], w1_ref[...],
                 preferred_element_type=jnp.float32)                 # [Np,Hp] f32
    m1 = (dinv * xw).astype(BF16)                                    # pre-scaled
    acc1 = jnp.dot(a, m1, preferred_element_type=jnp.float32)
    h = jnp.maximum(dinv * acc1 + b1_ref[...], 0.0)                  # f32 relu
    hw = jnp.dot(h.astype(BF16), w2_ref[...],
                 preferred_element_type=jnp.float32)                 # [Np,Cp]
    m2 = (dinv * hw).astype(BF16)
    acc2 = jnp.dot(a, m2, preferred_element_type=jnp.float32)
    o_ref[...] = dinv * acc2 + b2_ref[...]


def _fused_call(a_int, x_p, dinv, w1_p, b1_p, w2_p, b2_p, *, vmem_limit):
    np_pad, fp = x_p.shape
    hp = w1_p.shape[1]
    cp = w2_p.shape[1]
    flops = 2 * (np_pad * fp * hp + np_pad * np_pad * hp
                 + np_pad * hp * cp + np_pad * np_pad * cp)
    bytes_accessed = (int(a_int.size) + int(x_p.size) * 2 + int(dinv.size) * 4
                      + int(w1_p.size) * 2 + int(w2_p.size) * 2
                      + int(b1_p.size) * 4 + int(b2_p.size) * 4 + np_pad * cp * 4)
    vmem = pl.BlockSpec(memory_space=pltpu.MemorySpace.VMEM)
    return pl.pallas_call(
        _fused_kernel,
        out_shape=jax.ShapeDtypeStruct((np_pad, cp), jnp.float32),
        in_specs=[vmem] * 7,
        out_specs=vmem,
        compiler_params=pltpu.CompilerParams(vmem_limit_bytes=vmem_limit),
        cost_estimate=pl.CostEstimate(flops=int(flops), transcendentals=0,
                                      bytes_accessed=int(bytes_accessed)),
    )(a_int, x_p, dinv, w1_p, b1_p, w2_p, b2_p)


# ---------------------------------------------------------------------------
# Kernel 2: row-tiled, pipelined GCN propagation over int8 (A + I) panels.
#   Pass 1 (W2 fused): out = bf16( dinv * (relu(dinv*((A+I)@M) + b1) @ W2) )
#   Pass 2           : out = f32 ( dinv * ((A+I)@M) + b2 )
# M is already pre-scaled by dinv rows; dinv stays f32 everywhere.
# ---------------------------------------------------------------------------
def _gcn_pass1_kernel(a_ref, m_ref, dinv_ref, b1_ref, w2_ref, o_ref):
    a = a_ref[...].astype(BF16)                                      # int8->bf16 (hidden under DMA)
    acc = jnp.dot(a, m_ref[...], preferred_element_type=jnp.float32)
    h = jnp.maximum(dinv_ref[...] * acc + b1_ref[...], 0.0)          # f32 relu
    hw = jnp.dot(h.astype(BF16), w2_ref[...],
                 preferred_element_type=jnp.float32)
    o_ref[...] = (dinv_ref[...] * hw).astype(BF16)                   # bf16, lane-dense


def _gcn_pass2_kernel(a_ref, m_ref, dinv_ref, b2_ref, o_ref):
    a = a_ref[...].astype(BF16)
    acc = jnp.dot(a, m_ref[...], preferred_element_type=jnp.float32)
    o_ref[...] = dinv_ref[...] * acc + b2_ref[...]                   # f32, lane-dense


def _pick_row_tile(np_pad, resident_bytes, f_out, out_itemsize, vmem_limit):
    # Largest multiple of 128 dividing Np such that ALL live buffers fit:
    # resident (single-buffered) M/W2/bias plus double-buffered int8 A panel,
    # f32 dinv tile and output tile, with slack for compiler scratch.
    per_row = 2 * (np_pad * 1 + 1 * 4 + f_out * out_itemsize)
    slack = 2 * 1024 * 1024
    avail = max(vmem_limit - resident_bytes - slack, per_row * LANE)
    cap_rows = avail // per_row
    tm = LANE
    for cand in range(LANE, np_pad + 1, LANE):
        if np_pad % cand == 0 and cand <= cap_rows:
            tm = cand
    return tm


def _propagate(a_int, m_bf16, dinv, bias, w2_bf16, *, vmem_limit):
    np_pad = a_int.shape[0]
    f_m = m_bf16.shape[1]
    fuse2 = w2_bf16 is not None
    f_out = w2_bf16.shape[1] if fuse2 else f_m
    out_dtype = BF16 if fuse2 else jnp.float32
    out_itemsize = 2 if fuse2 else 4

    resident = np_pad * f_m * 2 + (int(w2_bf16.size) * 2 if fuse2 else 0) + f_m * 4
    tm = _pick_row_tile(np_pad, resident, f_out, out_itemsize, vmem_limit)
    grid = (np_pad // tm,)

    a_spec = pl.BlockSpec((tm, np_pad), lambda i: (i, 0))            # streamed panels
    dinv_spec = pl.BlockSpec((tm, 1), lambda i: (i, 0))
    m_spec = pl.BlockSpec((np_pad, f_m), lambda i: (0, 0),
                          pipeline_mode=pl.Buffered(1))              # resident, 1 buffer
    b_spec = pl.BlockSpec((1, f_m), lambda i: (0, 0),
                          pipeline_mode=pl.Buffered(1))

    in_specs = [a_spec, m_spec, dinv_spec, b_spec]
    args = [a_int, m_bf16, dinv, bias]
    kernel = _gcn_pass2_kernel
    flops = 2 * np_pad * np_pad * f_m
    if fuse2:
        in_specs.append(pl.BlockSpec((f_m, f_out), lambda i: (0, 0),
                                     pipeline_mode=pl.Buffered(1)))
        args.append(w2_bf16)
        kernel = _gcn_pass1_kernel
        flops += 2 * np_pad * f_m * f_out

    bytes_accessed = (np_pad * np_pad * 1 + np_pad * f_m * 2 + np_pad * 4
                      + f_m * 4 + (f_m * f_out * 2 if fuse2 else 0)
                      + np_pad * f_out * out_itemsize)

    return pl.pallas_call(
        kernel,
        out_shape=jax.ShapeDtypeStruct((np_pad, f_out), out_dtype),
        grid_spec=pltpu.PrefetchScalarGridSpec(
            num_scalar_prefetch=0,
            grid=grid,
            in_specs=in_specs,
            out_specs=pl.BlockSpec((tm, f_out), lambda i: (i, 0)),
        ),
        compiler_params=pltpu.CompilerParams(
            dimension_semantics=("parallel",),       # v7x: 2 TCs split row tiles
            vmem_limit_bytes=vmem_limit,
        ),
        cost_estimate=pl.CostEstimate(flops=int(flops), transcendentals=0,
                                      bytes_accessed=int(bytes_accessed)),
    )(*args)


# ---------------------------------------------------------------------------
# Encoder wrapper: pad to lane-dense shapes, cast to bf16, pick code path.
# ---------------------------------------------------------------------------
def gcn_forward(x, edge_index, w1, b1, w2, b2, *, use_tiled=None):
    n, f_in = x.shape
    hidden = w1.shape[1]
    out_c = w2.shape[1]
    np_pad = _round_up(n, LANE)
    fp = _round_up(f_in, LANE)
    hp = _round_up(hidden, LANE)
    cp = _round_up(out_c, LANE)

    a_int, dinv = build_graph_operands(edge_index, n, np_pad)

    x_p = jnp.zeros((np_pad, fp), BF16).at[:n, :f_in].set(x.astype(BF16))
    w1_p = jnp.zeros((fp, hp), BF16).at[:f_in, :hidden].set(w1.astype(BF16))
    w2_p = jnp.zeros((hp, cp), BF16).at[:hidden, :out_c].set(w2.astype(BF16))
    b1_p = jnp.zeros((1, hp), jnp.float32).at[0, :hidden].set(
        b1.reshape(-1).astype(jnp.float32))
    b2_p = jnp.zeros((1, cp), jnp.float32).at[0, :out_c].set(
        b2.reshape(-1).astype(jnp.float32))

    vmem_limit = _scoped_vmem_limit()
    if use_tiled is None:
        use_tiled = np_pad > 1024   # mid/large graphs -> row-parallel tiled path

    if not use_tiled:
        z_p = _fused_call(a_int, x_p, dinv, w1_p, b1_p, w2_p, b2_p,
                          vmem_limit=vmem_limit)
    else:
        # X @ W1 badly underfills the MXU (K = in_channels); keep it as one
        # whole-array XLA dot and pre-scale by dinv (pass-1 kernel input).
        xw = jnp.dot(x_p, w1_p, preferred_element_type=jnp.float32)
        m1 = (dinv * xw).astype(BF16)
        # Pass 1 (W2 fused in-kernel): m2 = dinv * (H @ W2), bf16.
        m2 = _propagate(a_int, m1, dinv, b1_p, w2_p, vmem_limit=vmem_limit)
        # Pass 2: Z = dinv * ((A+I) @ m2) + b2 = A_hat @ (H W2) + b2, f32.
        z_p = _propagate(a_int, m2, dinv, b2_p, None, vmem_limit=vmem_limit)

    return z_p[:n, :out_c]


def reference_normalized_adjacency(edge_index, num_nodes):
    """Dense f32 D^{-1/2}(A+I)D^{-1/2} (test reference only)."""
    src, dst = edge_index
    loop = jnp.arange(num_nodes, dtype=src.dtype)
    src = jnp.concatenate([src, loop])
    dst = jnp.concatenate([dst, loop])
    a = jnp.zeros((num_nodes, num_nodes), jnp.float32).at[dst, src].add(1.0)
    deg = a.sum(axis=1)
    dinv = jnp.where(deg > 0.0, jax.lax.rsqrt(deg), 0.0)
    return dinv[:, None] * a * dinv[None, :]


def glorot(key, fan_in, fan_out):
    limit = jnp.sqrt(6.0 / (fan_in + fan_out))
    return jax.random.uniform(key, (fan_in, fan_out), jnp.float32, -limit, limit)


if __name__ == "__main__":
    N = 64                 # nodes
    IN_CHANNELS = 16
    OUT_CHANNELS = 8
    HIDDEN = 2 * OUT_CHANNELS

    key = jax.random.PRNGKey(0)
    kx, ke, k1, k2, kb1, kb2 = jax.random.split(key, 6)

    # Node features and a random undirected edge list (edge_index shape [2, E]).
    x = jax.random.normal(kx, (N, IN_CHANNELS), jnp.float32)
    num_raw_edges = 256
    src = jax.random.randint(ke, (num_raw_edges,), 0, N, jnp.int32)
    dst = jax.random.randint(jax.random.fold_in(ke, 1), (num_raw_edges,), 0, N, jnp.int32)
    edge_index = jnp.stack([jnp.concatenate([src, dst]),
                            jnp.concatenate([dst, src])])     # symmetric, [2, 512]

    # GCNConv params (Linear(in, out, bias=False) + bias), stored as [F_in, F_out].
    w1 = glorot(k1, IN_CHANNELS, HIDDEN)
    w2 = glorot(k2, HIDDEN, OUT_CHANNELS)
    b1 = 0.01 * jax.random.normal(kb1, (1, HIDDEN), jnp.float32)
    b2 = 0.01 * jax.random.normal(kb2, (1, OUT_CHANNELS), jnp.float32)

    # Jit the whole pipeline; exercise both the fused and the tiled path.
    fwd_fused = jax.jit(functools.partial(gcn_forward, use_tiled=False))
    fwd_tiled = jax.jit(functools.partial(gcn_forward, use_tiled=True))
    z_fused = jax.block_until_ready(fwd_fused(x, edge_index, w1, b1, w2, b2))
    z_tiled = jax.block_until_ready(fwd_tiled(x, edge_index, w1, b1, w2, b2))

    # Reference 1: pure-JAX with identical cast points / factorization.
    np_pad = _round_up(N, LANE)
    fp = _round_up(IN_CHANNELS, LANE)
    hp = _round_up(HIDDEN, LANE)
    cp = _round_up(OUT_CHANNELS, LANE)
    a_int, dinv = build_graph_operands(edge_index, N, np_pad)
    x_p = jnp.zeros((np_pad, fp), BF16).at[:N, :IN_CHANNELS].set(x.astype(BF16))
    w1_p = jnp.zeros((fp, hp), BF16).at[:IN_CHANNELS, :HIDDEN].set(w1.astype(BF16))
    w2_p = jnp.zeros((hp, cp), BF16).at[:HIDDEN, :OUT_CHANNELS].set(w2.astype(BF16))
    b1_p = jnp.zeros((1, hp), jnp.float32).at[0, :HIDDEN].set(b1.reshape(-1))
    b2_p = jnp.zeros((1, cp), jnp.float32).at[0, :OUT_CHANNELS].set(b2.reshape(-1))
    a_bf = a_int.astype(BF16)
    m1 = (dinv * jnp.dot(x_p, w1_p, preferred_element_type=jnp.float32)).astype(BF16)
    h_ref = jnp.maximum(dinv * jnp.dot(a_bf, m1, preferred_element_type=jnp.float32)
                        + b1_p, 0.0)
    m2 = (dinv * jnp.dot(h_ref.astype(BF16), w2_p,
                         preferred_element_type=jnp.float32)).astype(BF16)
    z_ref_bf16 = (dinv * jnp.dot(a_bf, m2, preferred_element_type=jnp.float32)
                  + b2_p)[:N, :OUT_CHANNELS]

    # Reference 2: pure f32 GCN with dense A_hat.
    a_hat = reference_normalized_adjacency(edge_index, N)
    h_f32 = jnp.maximum(a_hat @ (x @ w1) + b1, 0.0)
    z_ref_f32 = a_hat @ (h_f32 @ w2) + b2

    assert z_fused.shape == (N, OUT_CHANNELS)
    assert z_tiled.shape == (N, OUT_CHANNELS)
    assert jnp.allclose(z_fused, z_ref_bf16, atol=2e-2, rtol=2e-2)
    assert jnp.allclose(z_tiled, z_ref_bf16, atol=2e-2, rtol=2e-2)
    assert jnp.allclose(z_fused, z_ref_f32, atol=1e-1, rtol=1e-1)
    assert jnp.allclose(z_tiled, z_ref_f32, atol=1e-1, rtol=1e-1)

    print("KERNEL_OK")
</pallas_src>

<mosaic_0001>
module attributes {stable_mosaic.version = 11 : i64} {
  func.func @_fused_kernel(%arg0: memref<128x128xi8, #tpu.memory_space<vmem>>, %arg1: memref<128x128xbf16, #tpu.memory_space<vmem>>, %arg2: memref<128x1xf32, #tpu.memory_space<vmem>>, %arg3: memref<128x128xbf16, #tpu.memory_space<vmem>>, %arg4: memref<1x128xf32, #tpu.memory_space<vmem>>, %arg5: memref<128x128xbf16, #tpu.memory_space<vmem>>, %arg6: memref<1x128xf32, #tpu.memory_space<vmem>>, %arg7: memref<128x128xf32, #tpu.memory_space<vmem>>) attributes {dimension_semantics = [], scalar_prefetch = 0 : i64, scratch_operands = 0 : i64, tpu.core_type = #tpu.core_type<tc>} {
    %c0 = arith.constant 0 : index
    %c0_0 = arith.constant 0 : index
    %0 = vector.load %arg0[%c0, %c0_0] : memref<128x128xi8, #tpu.memory_space<vmem>>, vector<128x128xi8>
    %1 = arith.sitofp %0 : vector<128x128xi8> to vector<128x128xbf16>
    %c0_1 = arith.constant 0 : index
    %c0_2 = arith.constant 0 : index
    %2 = vector.load %arg2[%c0_1, %c0_2] : memref<128x1xf32, #tpu.memory_space<vmem>>, vector<128x1xf32>
    %c0_3 = arith.constant 0 : index
    %c0_4 = arith.constant 0 : index
    %3 = vector.load %arg1[%c0_3, %c0_4] : memref<128x128xbf16, #tpu.memory_space<vmem>>, vector<128x128xbf16>
    %c0_5 = arith.constant 0 : index
    %c0_6 = arith.constant 0 : index
    %4 = vector.load %arg3[%c0_5, %c0_6] : memref<128x128xbf16, #tpu.memory_space<vmem>>, vector<128x128xbf16>
    %cst = arith.constant dense<0.000000e+00> : vector<128x128xf32>
    %5 = tpu.matmul %3, %4, %cst {dimension_numbers = #tpu.dot_dimension_numbers<[1], [0], [0], [1], [0, 0, 1, 1], [], []>} : vector<128x128xbf16>, vector<128x128xbf16>, vector<128x128xf32> -> vector<128x128xf32>
    %6 = vector.broadcast %2 : vector<128x1xf32> to vector<128x128xf32>
    %7 = arith.mulf %6, %5 : vector<128x128xf32>
    %8 = arith.truncf %7 : vector<128x128xf32> to vector<128x128xbf16>
    %cst_7 = arith.constant dense<0.000000e+00> : vector<128x128xf32>
    %9 = tpu.matmul %1, %8, %cst_7 {dimension_numbers = #tpu.dot_dimension_numbers<[1], [0], [0], [1], [0, 0, 1, 1], [], []>} : vector<128x128xbf16>, vector<128x128xbf16>, vector<128x128xf32> -> vector<128x128xf32>
    %10 = vector.broadcast %2 : vector<128x1xf32> to vector<128x128xf32>
    %11 = arith.mulf %10, %9 : vector<128x128xf32>
    %c0_8 = arith.constant 0 : index
    %c0_9 = arith.constant 0 : index
    %12 = vector.load %arg4[%c0_8, %c0_9] : memref<1x128xf32, #tpu.memory_space<vmem>>, vector<1x128xf32>
    %13 = vector.broadcast %12 : vector<1x128xf32> to vector<128x128xf32>
    %14 = arith.addf %11, %13 : vector<128x128xf32>
    %cst_10 = arith.constant 0.000000e+00 : f32
    %15 = vector.broadcast %cst_10 : f32 to vector<128x128xf32>
    %16 = arith.maximumf %14, %15 : vector<128x128xf32>
    %17 = arith.truncf %16 : vector<128x128xf32> to vector<128x128xbf16>
    %c0_11 = arith.constant 0 : index
    %c0_12 = arith.constant 0 : index
    %18 = vector.load %arg5[%c0_11, %c0_12] : memref<128x128xbf16, #tpu.memory_space<vmem>>, vector<128x128xbf16>
    %cst_13 = arith.constant dense<0.000000e+00> : vector<128x128xf32>
    %19 = tpu.matmul %17, %18, %cst_13 {dimension_numbers = #tpu.dot_dimension_numbers<[1], [0], [0], [1], [0, 0, 1, 1], [], []>} : vector<128x128xbf16>, vector<128x128xbf16>, vector<128x128xf32> -> vector<128x128xf32>
    %20 = vector.broadcast %2 : vector<128x1xf32> to vector<128x128xf32>
    %21 = arith.mulf %20, %19 : vector<128x128xf32>
    %22 = arith.truncf %21 : vector<128x128xf32> to vector<128x128xbf16>
    %cst_14 = arith.constant dense<0.000000e+00> : vector<128x128xf32>
    %23 = tpu.matmul %1, %22, %cst_14 {dimension_numbers = #tpu.dot_dimension_numbers<[1], [0], [0], [1], [0, 0, 1, 1], [], []>} : vector<128x128xbf16>, vector<128x128xbf16>, vector<128x128xf32> -> vector<128x128xf32>
    %24 = vector.broadcast %2 : vector<128x1xf32> to vector<128x128xf32>
    %25 = arith.mulf %24, %23 : vector<128x128xf32>
    %c0_15 = arith.constant 0 : index
    %c0_16 = arith.constant 0 : index
    %26 = vector.load %arg6[%c0_15, %c0_16] : memref<1x128xf32, #tpu.memory_space<vmem>>, vector<1x128xf32>
    %27 = vector.broadcast %26 : vector<1x128xf32> to vector<128x128xf32>
    %28 = arith.addf %25, %27 : vector<128x128xf32>
    %c0_17 = arith.constant 0 : index
    %c0_18 = arith.constant 0 : index
    %29 = vector.load %arg7[%c0_17, %c0_18] : memref<128x128xf32, #tpu.memory_space<vmem>>, vector<128x128xf32>
    tpu.vector_store %arg7[%c0_17, %c0_18], %28 {strides = array<i32>} : memref<128x128xf32, #tpu.memory_space<vmem>>, vector<128x128xf32>,
    return
  }
}

</mosaic_0001>

<llo_original>
// kernel: gcn_forward.1
$region0: #{gcn_forward.1}
  #allocation0 [shape = 'u32[]', space=smem, size = 0x4, offset = 0x4, fixed_abs, tag = 'smem constant byte address 0x4 - core index']
  #allocation1 [shape = 'u32[72,128]{1,0:T(1,128)}', space=vmem, size = 0x9000, scoped, tag = 'internal scratch']
  %s0 = inlined_call_operand.vmem [shape: s8[128,128], index: 0, kind: input, shape index: {}]
  %s1 = inlined_call_operand.vmem [shape: bf16[128,128], index: 1, kind: input, shape index: {}]
  %s2 = inlined_call_operand.vmem [shape: f32[128,1], index: 2, kind: input, shape index: {}]
  %s3 = inlined_call_operand.vmem [shape: bf16[128,128], index: 3, kind: input, shape index: {}]
  %s4 = inlined_call_operand.vmem [shape: f32[1,128], index: 4, kind: input, shape index: {}]
  %s5 = inlined_call_operand.vmem [shape: bf16[128,128], index: 5, kind: input, shape index: {}]
  %s6 = inlined_call_operand.vmem [shape: f32[1,128], index: 6, kind: input, shape index: {}]
  %s7 = inlined_call_operand.vmem [shape: f32[128,128], index: 7, kind: output, shape index: {}]
  %s8 = sld [smem:[#allocation0]]
  $region38: #{gcn_forward.1} parent=0
    _
  %s10 = ssub.s32 1, %s8
  %s11 = scalar_select 0, %s10, %s8
  // Predicated region
  $region2: #{gcn_forward.1} parent=0 // pred_check
    _
  $region3: #{gcn_forward.1} parent=0 // pred_check_branch
    %13 = sbr.rel (0) target = $region5
  $region4: #{gcn_forward.1} parent=0 // pred_region
    _
  $region5: #{gcn_forward.1} parent=0 // pred_fallthru
    _
  // Predicated region
  $region6: #{gcn_forward.1} parent=0 // pred_check
    _
  $region7: #{gcn_forward.1} parent=0 // pred_check_branch
    %15 = sbr.rel (0) target = $region9
  $region8: #{gcn_forward.1} parent=0 // pred_region
    _
  $region9: #{gcn_forward.1} parent=0 // pred_fallthru
    _
  // Predicated region
  $region10: #{gcn_forward.1} parent=0 // pred_check
    _
  $region11: #{gcn_forward.1} parent=0 // pred_check_branch
    %17 = sbr.rel (0) target = $region13
  $region12: #{gcn_forward.1} parent=0 // pred_region
    _
  $region13: #{gcn_forward.1} parent=0 // pred_fallthru
    _
  // Predicated region
  $region14: #{gcn_forward.1} parent=0 // pred_check
    _
  $region15: #{gcn_forward.1} parent=0 // pred_check_branch
    %19 = sbr.rel (0) target = $region17
  $region16: #{gcn_forward.1} parent=0 // pred_region
    _
  $region17: #{gcn_forward.1} parent=0 // pred_fallthru
    _
  // Predicated region
  $region18: #{gcn_forward.1} parent=0 // pred_check
    _
  $region19: #{gcn_forward.1} parent=0 // pred_check_branch
    %21 = sbr.rel (0) target = $region21
  $region20: #{gcn_forward.1} parent=0 // pred_region
    _
  $region21: #{gcn_forward.1} parent=0 // pred_fallthru
    _
  // Predicated region
  $region22: #{gcn_forward.1} parent=0 // pred_check
    _
  $region23: #{gcn_forward.1} parent=0 // pred_check_branch
    %23 = sbr.rel (0) target = $region25
  $region24: #{gcn_forward.1} parent=0 // pred_region
    _
  $region25: #{gcn_forward.1} parent=0 // pred_fallthru
    _
  // Predicated region
  $region26: #{gcn_forward.1} parent=0 // pred_check
    _
  $region27: #{gcn_forward.1} parent=0 // pred_check_branch
    %25 = sbr.rel (0) target = $region29
  $region28: #{gcn_forward.1} parent=0 // pred_region
    _
  $region29: #{gcn_forward.1} parent=0 // pred_fallthru
    _
  %v26 = vld [vmem:[%s0] sm:$0x3]
  %v27 = vld [vmem:[%s0 + $0x2] sm:$0x3]
  %v28 = vld [vmem:[%s0 + $0x4] sm:$0x3]
  %v29 = vld [vmem:[%s0 + $0x6] sm:$0x3]
  %v30 = vld [vmem:[%s0 + $0x8] sm:$0x3]
  %v31 = vld [vmem:[%s0 + $0xa] sm:$0x3]
  %v32 = vld [vmem:[%s0 + $0xc] sm:$0x3]
  %v33 = vld [vmem:[%s0 + $0xe] sm:$0x3]
  %v34 = vld [vmem:[%s0 + $0x10] sm:$0x3]
  %v35 = vld [vmem:[%s0 + $0x12] sm:$0x3]
  %v36 = vld [vmem:[%s0 + $0x14] sm:$0x3]
  %v37 = vld [vmem:[%s0 + $0x16] sm:$0x3]
  %v38 = vld [vmem:[%s0 + $0x18] sm:$0x3]
  %v39 = vld [vmem:[%s0 + $0x1a] sm:$0x3]
  %v40 = vld [vmem:[%s0 + $0x1c] sm:$0x3]
  %v41 = vld [vmem:[%s0 + $0x1e] sm:$0x3]
  %v42 = vunpack.c.0.s8 %v26
  %v43 = vunpack.c.0.s8 %v27
  %v44 = vunpack.c.0.s8 %v28
  %v45 = vunpack.c.0.s8 %v29
  %v46 = vunpack.c.0.s8 %v30
  %v47 = vunpack.c.0.s8 %v31
  %v48 = vunpack.c.0.s8 %v32
  %v49 = vunpack.c.0.s8 %v33
  %v50 = vunpack.c.0.s8 %v34
  %v51 = vunpack.c.0.s8 %v35
  %v52 = vunpack.c.0.s8 %v36
  %v53 = vunpack.c.0.s8 %v37
  %v54 = vunpack.c.0.s8 %v38
  %v55 = vunpack.c.0.s8 %v39
  %v56 = vunpack.c.0.s8 %v40
  %v57 = vunpack.c.0.s8 %v41
  %v58 = vcvt.s32.f32 %v42
  %v59 = vcvt.s32.f32 %v43
  %v60 = vcvt.s32.f32 %v44
  %v61 = vcvt.s32.f32 %v45
  %v62 = vcvt.s32.f32 %v46
  %v63 = vcvt.s32.f32 %v47
  %v64 = vcvt.s32.f32 %v48
  %v65 = vcvt.s32.f32 %v49
  %v66 = vcvt.s32.f32 %v50
  %v67 = vcvt.s32.f32 %v51
  %v68 = vcvt.s32.f32 %v52
  %v69 = vcvt.s32.f32 %v53
  %v70 = vcvt.s32.f32 %v54
  %v71 = vcvt.s32.f32 %v55
  %v72 = vcvt.s32.f32 %v56
  %v73 = vcvt.s32.f32 %v57
  %v74 = vpack.c.bf16 %v59, %v58
  %v75 = vpack.c.bf16 %v61, %v60
  %v76 = vpack.c.bf16 %v63, %v62
  %v77 = vpack.c.bf16 %v65, %v64
  %v78 = vpack.c.bf16 %v67, %v66
  %v79 = vpack.c.bf16 %v69, %v68
  %v80 = vpack.c.bf16 %v71, %v70
  %v81 = vpack.c.bf16 %v73, %v72
  %v82 = vld [vmem:[%s2] sm:$0xff]
  %v83 = vld [vmem:[%s2 + $0x8] sm:$0xff]
  %v84 = vld [vmem:[%s2 + $0x10] sm:$0xff]
  %v85 = vld [vmem:[%s2 + $0x18] sm:$0xff]
  %v86 = vld [vmem:[%s2 + $0x20] sm:$0xff]
  %v87 = vld [vmem:[%s2 + $0x28] sm:$0xff]
  %v88 = vld [vmem:[%s2 + $0x30] sm:$0xff]
  %v89 = vld [vmem:[%s2 + $0x38] sm:$0xff]
  %v90 = vld [vmem:[%s2 + $0x40] sm:$0xff]
  %v91 = vld [vmem:[%s2 + $0x48] sm:$0xff]
  %v92 = vld [vmem:[%s2 + $0x50] sm:$0xff]
  %v93 = vld [vmem:[%s2 + $0x58] sm:$0xff]
  %v94 = vld [vmem:[%s2 + $0x60] sm:$0xff]
  %v95 = vld [vmem:[%s2 + $0x68] sm:$0xff]
  %v96 = vld [vmem:[%s2 + $0x70] sm:$0xff]
  %v97 = vld [vmem:[%s2 + $0x78] sm:$0xff]
  %v98 = vld [vmem:[%s1] sm:$0xf]
  %v99 = vld [vmem:[%s1 + $0x4] sm:$0xf]
  %v100 = vld [vmem:[%s1 + $0x8] sm:$0xf]
  %v101 = vld [vmem:[%s1 + $0xc] sm:$0xf]
  %v102 = vld [vmem:[%s1 + $0x10] sm:$0xf]
  %v103 = vld [vmem:[%s1 + $0x14] sm:$0xf]
  %v104 = vld [vmem:[%s1 + $0x18] sm:$0xf]
  %v105 = vld [vmem:[%s1 + $0x1c] sm:$0xf]
  %v106 = vld [vmem:[%s1 + $0x20] sm:$0xf]
  %v107 = vld [vmem:[%s1 + $0x24] sm:$0xf]
  %v108 = vld [vmem:[%s1 + $0x28] sm:$0xf]
  %v109 = vld [vmem:[%s1 + $0x2c] sm:$0xf]
  %v110 = vld [vmem:[%s1 + $0x30] sm:$0xf]
  %v111 = vld [vmem:[%s1 + $0x34] sm:$0xf]
  %v112 = vld [vmem:[%s1 + $0x38] sm:$0xf]
  %v113 = vld [vmem:[%s1 + $0x3c] sm:$0xf]
  %v114 = vld [vmem:[%s3] sm:$0xf]
  %v115 = vld [vmem:[%s3 + $0x4] sm:$0xf]
  %v116 = vld [vmem:[%s3 + $0x8] sm:$0xf]
  %v117 = vld [vmem:[%s3 + $0xc] sm:$0xf]
  %v118 = vld [vmem:[%s3 + $0x10] sm:$0xf]
  %v119 = vld [vmem:[%s3 + $0x14] sm:$0xf]
  %v120 = vld [vmem:[%s3 + $0x18] sm:$0xf]
  %v121 = vld [vmem:[%s3 + $0x1c] sm:$0xf]
  %v122 = vld [vmem:[%s3 + $0x20] sm:$0xf]
  %v123 = vld [vmem:[%s3 + $0x24] sm:$0xf]
  %v124 = vld [vmem:[%s3 + $0x28] sm:$0xf]
  %v125 = vld [vmem:[%s3 + $0x2c] sm:$0xf]
  %v126 = vld [vmem:[%s3 + $0x30] sm:$0xf]
  %v127 = vld [vmem:[%s3 + $0x34] sm:$0xf]
  %v128 = vld [vmem:[%s3 + $0x38] sm:$0xf]
  %v129 = vld [vmem:[%s3 + $0x3c] sm:$0xf]
  %v146 = vunpack.c.l.b16 %v98
  %v147 = vunpack.c.l.b16 %v99
  %v148 = vunpack.c.l.b16 %v100
  %v149 = vunpack.c.l.b16 %v101
  %v150 = vunpack.c.l.b16 %v102
  %v151 = vunpack.c.l.b16 %v103
  %v152 = vunpack.c.l.b16 %v104
  %v153 = vunpack.c.l.b16 %v105
  %v154 = vunpack.c.l.b16 %v106
  %v155 = vunpack.c.l.b16 %v107
  %v156 = vunpack.c.l.b16 %v108
  %v157 = vunpack.c.l.b16 %v109
  %v158 = vunpack.c.l.b16 %v110
  %v159 = vunpack.c.l.b16 %v111
  %v160 = vunpack.c.l.b16 %v112
  %v161 = vunpack.c.l.b16 %v113
  %v162 = vpack.c.b16 %v147, %v146
  %v163 = vpack.c.b16 %v149, %v148
  %v164 = vpack.c.b16 %v151, %v150
  %v165 = vpack.c.b16 %v153, %v152
  %v166 = vpack.c.b16 %v155, %v154
  %v167 = vpack.c.b16 %v157, %v156
  %v168 = vpack.c.b16 %v159, %v158
  %v169 = vpack.c.b16 %v161, %v160
  %v194 = vunpack.c.l.b16 %v114
  %v195 = vunpack.c.l.b16 %v115
  %v196 = vunpack.c.l.b16 %v116
  %v197 = vunpack.c.l.b16 %v117
  %v198 = vunpack.c.l.b16 %v118
  %v199 = vunpack.c.l.b16 %v119
  %v200 = vunpack.c.l.b16 %v120
  %v201 = vunpack.c.l.b16 %v121
  %v202 = vunpack.c.l.b16 %v122
  %v203 = vunpack.c.l.b16 %v123
  %v204 = vunpack.c.l.b16 %v124
  %v205 = vunpack.c.l.b16 %v125
  %v206 = vunpack.c.l.b16 %v126
  %v207 = vunpack.c.l.b16 %v127
  %v208 = vunpack.c.l.b16 %v128
  %v209 = vunpack.c.l.b16 %v129
  %v210 = vpack.c.b16 %v195, %v194
  %v211 = vpack.c.b16 %v197, %v196
  %v212 = vpack.c.b16 %v199, %v198
  %v213 = vpack.c.b16 %v201, %v200
  %v214 = vpack.c.b16 %v203, %v202
  %v215 = vpack.c.b16 %v205, %v204
  %v216 = vpack.c.b16 %v207, %v206
  %v217 = vpack.c.b16 %v209, %v208
  %226 = vmatpush.bf16.msra.mxu0 %v217
  %227 = vmatpush.bf16.msra.mxu0 %v216
  %228 = vmatpush.bf16.msra.mxu0 %v215
  %229 = vmatpush.bf16.msra.mxu0 %v214
  %230 = vmatpush.bf16.msra.mxu0 %v213
  %231 = vmatpush.bf16.msra.mxu0 %v212
  %232 = vmatpush.bf16.msra.mxu0 %v211
  %233 = vmatpush.bf16.msra.mxu0 %v210
  %234 = vmatmul.bf16.gmra.mxu0 %v162
  %v235 = vpop.f32.mrf.mxu0
  %v236 = vadd.f32 0.0, %v235
  %v237 = vpop.f32.mrf.mxu0
  %v238 = vadd.f32 0.0, %v237
  %239 = vmatmul.bf16.gmra.mxu0 %v163
  %v240 = vpop.f32.mrf.mxu0
  %v241 = vadd.f32 0.0, %v240
  %v242 = vpop.f32.mrf.mxu0
  %v243 = vadd.f32 0.0, %v242
  %244 = vmatmul.bf16.gmra.mxu0 %v164
  %v245 = vpop.f32.mrf.mxu0
  %v246 = vadd.f32 0.0, %v245
  %v247 = vpop.f32.mrf.mxu0
  %v248 = vadd.f32 0.0, %v247
  %249 = vmatmul.bf16.gmra.mxu0 %v165
  %v250 = vpop.f32.mrf.mxu0
  %v251 = vadd.f32 0.0, %v250
  %v252 = vpop.f32.mrf.mxu0
  %v253 = vadd.f32 0.0, %v252
  %254 = vmatmul.bf16.gmra.mxu0 %v166
  %v255 = vpop.f32.mrf.mxu0
  %v256 = vadd.f32 0.0, %v255
  %v257 = vpop.f32.mrf.mxu0
  %v258 = vadd.f32 0.0, %v257
  %259 = vmatmul.bf16.gmra.mxu0 %v167
  %v260 = vpop.f32.mrf.mxu0
  %v261 = vadd.f32 0.0, %v260
  %v262 = vpop.f32.mrf.mxu0
  %v263 = vadd.f32 0.0, %v262
  %264 = vmatmul.bf16.gmra.mxu0 %v168
  %v265 = vpop.f32.mrf.mxu0
  %v266 = vadd.f32 0.0, %v265
  %v267 = vpop.f32.mrf.mxu0
  %v268 = vadd.f32 0.0, %v267
  %269 = vmatmul.bf16.gmra.mxu0 %v169
  %v270 = vpop.f32.mrf.mxu0
  %v271 = vadd.f32 0.0, %v270
  %v272 = vpop.f32.mrf.mxu0
  %v273 = vadd.f32 0.0, %v272
  %274 = vdwg.mxu0
  %276 = vset.pattern.permute.xlu0 0
  %277 = vperm.xlu0 %276, %v82
  %v278 = vpop.permute.xlu0 %277
  %281 = vset.pattern.permute.xlu0 0
  %282 = vperm.xlu0 %281, %v83
  %v283 = vpop.permute.xlu0 %282
  %286 = vset.pattern.permute.xlu0 0
  %287 = vperm.xlu0 %286, %v84
  %v288 = vpop.permute.xlu0 %287
  %291 = vset.pattern.permute.xlu0 0
  %292 = vperm.xlu0 %291, %v85
  %v293 = vpop.permute.xlu0 %292
  %296 = vset.pattern.permute.xlu0 0
  %297 = vperm.xlu0 %296, %v86
  %v298 = vpop.permute.xlu0 %297
  %301 = vset.pattern.permute.xlu0 0
  %302 = vperm.xlu0 %301, %v87
  %v303 = vpop.permute.xlu0 %302
  %306 = vset.pattern.permute.xlu0 0
  %307 = vperm.xlu0 %306, %v88
  %v308 = vpop.permute.xlu0 %307
  %311 = vset.pattern.permute.xlu0 0
  %312 = vperm.xlu0 %311, %v89
  %v313 = vpop.permute.xlu0 %312
  %316 = vset.pattern.permute.xlu0 0
  %317 = vperm.xlu0 %316, %v90
  %v318 = vpop.permute.xlu0 %317
  %321 = vset.pattern.permute.xlu0 0
  %322 = vperm.xlu0 %321, %v91
  %v323 = vpop.permute.xlu0 %322
  %326 = vset.pattern.permute.xlu0 0
  %327 = vperm.xlu0 %326, %v92
  %v328 = vpop.permute.xlu0 %327
  %331 = vset.pattern.permute.xlu0 0
  %332 = vperm.xlu0 %331, %v93
  %v333 = vpop.permute.xlu0 %332
  %336 = vset.pattern.permute.xlu0 0
  %337 = vperm.xlu0 %336, %v94
  %v338 = vpop.permute.xlu0 %337
  %341 = vset.pattern.permute.xlu0 0
  %342 = vperm.xlu0 %341, %v95
  %v343 = vpop.permute.xlu0 %342
  %346 = vset.pattern.permute.xlu0 0
  %347 = vperm.xlu0 %346, %v96
  %v348 = vpop.permute.xlu0 %347
  %351 = vset.pattern.permute.xlu0 0
  %352 = vperm.xlu0 %351, %v97
  %v353 = vpop.permute.xlu0 %352
  %v355 = vmul.f32 %v278, %v236
  %v356 = vmul.f32 %v283, %v238
  %v357 = vmul.f32 %v288, %v241
  %v358 = vmul.f32 %v293, %v243
  %v359 = vmul.f32 %v298, %v246
  %v360 = vmul.f32 %v303, %v248
  %v361 = vmul.f32 %v308, %v251
  %v362 = vmul.f32 %v313, %v253
  %v363 = vmul.f32 %v318, %v256
  %v364 = vmul.f32 %v323, %v258
  %v365 = vmul.f32 %v328, %v261
  %v366 = vmul.f32 %v333, %v263
  %v367 = vmul.f32 %v338, %v266
  %v368 = vmul.f32 %v343, %v268
  %v369 = vmul.f32 %v348, %v271
  %v370 = vmul.f32 %v353, %v273
  %v371 = vpack.c.bf16 %v356, %v355
  %v372 = vpack.c.bf16 %v358, %v357
  %v373 = vpack.c.bf16 %v360, %v359
  %v374 = vpack.c.bf16 %v362, %v361
  %v375 = vpack.c.bf16 %v364, %v363
  %v376 = vpack.c.bf16 %v366, %v365
  %v377 = vpack.c.bf16 %v368, %v367
  %v378 = vpack.c.bf16 %v370, %v369
  %379 = vmatpush.bf16.msra.mxu0 %v378
  %380 = vmatpush.bf16.msra.mxu0 %v377
  %381 = vmatpush.bf16.msra.mxu0 %v376
  %382 = vmatpush.bf16.msra.mxu0 %v375
  %383 = vmatpush.bf16.msra.mxu0 %v374
  %384 = vmatpush.bf16.msra.mxu0 %v373
  %385 = vmatpush.bf16.msra.mxu0 %v372
  %386 = vmatpush.bf16.msra.mxu0 %v371
  %387 = vmatmul.bf16.gmra.mxu0 %v74
  %v388 = vpop.f32.mrf.mxu0
  %v389 = vadd.f32 0.0, %v388
  %v390 = vpop.f32.mrf.mxu0
  %v391 = vadd.f32 0.0, %v390
  %392 = vmatmul.bf16.gmra.mxu0 %v75
  %v393 = vpop.f32.mrf.mxu0
  %v394 = vadd.f32 0.0, %v393
  %v395 = vpop.f32.mrf.mxu0
  %v396 = vadd.f32 0.0, %v395
  %397 = vmatmul.bf16.gmra.mxu0 %v76
  %v398 = vpop.f32.mrf.mxu0
  %v399 = vadd.f32 0.0, %v398
  %v400 = vpop.f32.mrf.mxu0
  %v401 = vadd.f32 0.0, %v400
  %402 = vmatmul.bf16.gmra.mxu0 %v77
  %v403 = vpop.f32.mrf.mxu0
  %v404 = vadd.f32 0.0, %v403
  %v405 = vpop.f32.mrf.mxu0
  %v406 = vadd.f32 0.0, %v405
  %407 = vmatmul.bf16.gmra.mxu0 %v78
  %v408 = vpop.f32.mrf.mxu0
  %v409 = vadd.f32 0.0, %v408
  %v410 = vpop.f32.mrf.mxu0
  %v411 = vadd.f32 0.0, %v410
  %412 = vmatmul.bf16.gmra.mxu0 %v79
  %v413 = vpop.f32.mrf.mxu0
  %v414 = vadd.f32 0.0, %v413
  %v415 = vpop.f32.mrf.mxu0
  %v416 = vadd.f32 0.0, %v415
  %417 = vmatmul.bf16.gmra.mxu0 %v80
  %v418 = vpop.f32.mrf.mxu0
  %v419 = vadd.f32 0.0, %v418
  %v420 = vpop.f32.mrf.mxu0
  %v421 = vadd.f32 0.0, %v420
  %422 = vmatmul.bf16.gmra.mxu0 %v81
  %v423 = vpop.f32.mrf.mxu0
  %v424 = vadd.f32 0.0, %v423
  %v425 = vpop.f32.mrf.mxu0
  %v426 = vadd.f32 0.0, %v425
  %427 = vdwg.mxu0
  %v428 = vmul.f32 %v278, %v389
  %v429 = vmul.f32 %v283, %v391
  %v430 = vmul.f32 %v288, %v394
  %v431 = vmul.f32 %v293, %v396
  %v432 = vmul.f32 %v298, %v399
  %v433 = vmul.f32 %v303, %v401
  %v434 = vmul.f32 %v308, %v404
  %v435 = vmul.f32 %v313, %v406
  %v436 = vmul.f32 %v318, %v409
  %v437 = vmul.f32 %v323, %v411
  %v438 = vmul.f32 %v328, %v414
  %v439 = vmul.f32 %v333, %v416
  %v440 = vmul.f32 %v338, %v419
  %v441 = vmul.f32 %v343, %v421
  %v442 = vmul.f32 %v348, %v424
  %v443 = vmul.f32 %v353, %v426
  %v444 = vld [vmem:[%s4] sm:$0x1]
  %v446 = vperm.slane %v444, 0
  %v448 = vadd.f32 %v428, %v446
  %v449 = vadd.f32 %v429, %v446
  %v450 = vadd.f32 %v430, %v446
  %v451 = vadd.f32 %v431, %v446
  %v452 = vadd.f32 %v432, %v446
  %v453 = vadd.f32 %v433, %v446
  %v454 = vadd.f32 %v434, %v446
  %v455 = vadd.f32 %v435, %v446
  %v456 = vadd.f32 %v436, %v446
  %v457 = vadd.f32 %v437, %v446
  %v458 = vadd.f32 %v438, %v446
  %v459 = vadd.f32 %v439, %v446
  %v460 = vadd.f32 %v440, %v446
  %v461 = vadd.f32 %v441, %v446
  %v462 = vadd.f32 %v442, %v446
  %v463 = vadd.f32 %v443, %v446
  %v464 = vmax.f32 %v448, 0.0
  %v465 = vmax.f32 %v449, 0.0
  %v466 = vmax.f32 %v450, 0.0
  %v467 = vmax.f32 %v451, 0.0
  %v468 = vmax.f32 %v452, 0.0
  %v469 = vmax.f32 %v453, 0.0
  %v470 = vmax.f32 %v454, 0.0
  %v471 = vmax.f32 %v455, 0.0
  %v472 = vmax.f32 %v456, 0.0
  %v473 = vmax.f32 %v457, 0.0
  %v474 = vmax.f32 %v458, 0.0
  %v475 = vmax.f32 %v459, 0.0
  %v476 = vmax.f32 %v460, 0.0
  %v477 = vmax.f32 %v461, 0.0
  %v478 = vmax.f32 %v462, 0.0
  %v479 = vmax.f32 %v463, 0.0
  %v480 = vpack.c.bf16 %v465, %v464
  %v481 = vpack.c.bf16 %v467, %v466
  %v482 = vpack.c.bf16 %v469, %v468
  %v483 = vpack.c.bf16 %v471, %v470
  %v484 = vpack.c.bf16 %v473, %v472
  %v485 = vpack.c.bf16 %v475, %v474
  %v486 = vpack.c.bf16 %v477, %v476
  %v487 = vpack.c.bf16 %v479, %v478
  %v488 = vld [vmem:[%s5] sm:$0xf]
  %v489 = vld [vmem:[%s5 + $0x4] sm:$0xf]
  %v490 = vld [vmem:[%s5 + $0x8] sm:$0xf]
  %v491 = vld [vmem:[%s5 + $0xc] sm:$0xf]
  %v492 = vld [vmem:[%s5 + $0x10] sm:$0xf]
  %v493 = vld [vmem:[%s5 + $0x14] sm:$0xf]
  %v494 = vld [vmem:[%s5 + $0x18] sm:$0xf]
  %v495 = vld [vmem:[%s5 + $0x1c] sm:$0xf]
  %v496 = vld [vmem:[%s5 + $0x20] sm:$0xf]
  %v497 = vld [vmem:[%s5 + $0x24] sm:$0xf]
  %v498 = vld [vmem:[%s5 + $0x28] sm:$0xf]
  %v499 = vld [vmem:[%s5 + $0x2c] sm:$0xf]
  %v500 = vld [vmem:[%s5 + $0x30] sm:$0xf]
  %v501 = vld [vmem:[%s5 + $0x34] sm:$0xf]
  %v502 = vld [vmem:[%s5 + $0x38] sm:$0xf]
  %v503 = vld [vmem:[%s5 + $0x3c] sm:$0xf]
  %v520 = vunpack.c.l.b16 %v488
  %v521 = vunpack.c.l.b16 %v489
  %v522 = vunpack.c.l.b16 %v490
  %v523 = vunpack.c.l.b16 %v491
  %v524 = vunpack.c.l.b16 %v492
  %v525 = vunpack.c.l.b16 %v493
  %v526 = vunpack.c.l.b16 %v494
  %v527 = vunpack.c.l.b16 %v495
  %v528 = vunpack.c.l.b16 %v496
  %v529 = vunpack.c.l.b16 %v497
  %v530 = vunpack.c.l.b16 %v498
  %v531 = vunpack.c.l.b16 %v499
  %v532 = vunpack.c.l.b16 %v500
  %v533 = vunpack.c.l.b16 %v501
  %v534 = vunpack.c.l.b16 %v502
  %v535 = vunpack.c.l.b16 %v503
  %v536 = vpack.c.b16 %v521, %v520
  %v537 = vpack.c.b16 %v523, %v522
  %v538 = vpack.c.b16 %v525, %v524
  %v539 = vpack.c.b16 %v527, %v526
  %v540 = vpack.c.b16 %v529, %v528
  %v541 = vpack.c.b16 %v531, %v530
  %v542 = vpack.c.b16 %v533, %v532
  %v543 = vpack.c.b16 %v535, %v534
  %552 = vmatpush.bf16.msra.mxu0 %v543
  %553 = vmatpush.bf16.msra.mxu0 %v542
  %554 = vmatpush.bf16.msra.mxu0 %v541
  %555 = vmatpush.bf16.msra.mxu0 %v540
  %556 = vmatpush.bf16.msra.mxu0 %v539
  %557 = vmatpush.bf16.msra.mxu0 %v538
  %558 = vmatpush.bf16.msra.mxu0 %v537
  %559 = vmatpush.bf16.msra.mxu0 %v536
  %560 = vmatmul.bf16.gmra.mxu0 %v480
  %v561 = vpop.f32.mrf.mxu0
  %v562 = vadd.f32 0.0, %v561
  %v563 = vpop.f32.mrf.mxu0
  %v564 = vadd.f32 0.0, %v563
  %565 = vmatmul.bf16.gmra.mxu0 %v481
  %v566 = vpop.f32.mrf.mxu0
  %v567 = vadd.f32 0.0, %v566
  %v568 = vpop.f32.mrf.mxu0
  %v569 = vadd.f32 0.0, %v568
  %570 = vmatmul.bf16.gmra.mxu0 %v482
  %v571 = vpop.f32.mrf.mxu0
  %v572 = vadd.f32 0.0, %v571
  %v573 = vpop.f32.mrf.mxu0
  %v574 = vadd.f32 0.0, %v573
  %575 = vmatmul.bf16.gmra.mxu0 %v483
  %v576 = vpop.f32.mrf.mxu0
  %v577 = vadd.f32 0.0, %v576
  %v578 = vpop.f32.mrf.mxu0
  %v579 = vadd.f32 0.0, %v578
  %580 = vmatmul.bf16.gmra.mxu0 %v484
  %v581 = vpop.f32.mrf.mxu0
  %v582 = vadd.f32 0.0, %v581
  %v583 = vpop.f32.mrf.mxu0
  %v584 = vadd.f32 0.0, %v583
  %585 = vmatmul.bf16.gmra.mxu0 %v485
  %v586 = vpop.f32.mrf.mxu0
  %v587 = vadd.f32 0.0, %v586
  %v588 = vpop.f32.mrf.mxu0
  %v589 = vadd.f32 0.0, %v588
  %590 = vmatmul.bf16.gmra.mxu0 %v486
  %v591 = vpop.f32.mrf.mxu0
  %v592 = vadd.f32 0.0, %v591
  %v593 = vpop.f32.mrf.mxu0
  %v594 = vadd.f32 0.0, %v593
  %595 = vmatmul.bf16.gmra.mxu0 %v487
  %v596 = vpop.f32.mrf.mxu0
  %v597 = vadd.f32 0.0, %v596
  %v598 = vpop.f32.mrf.mxu0
  %v599 = vadd.f32 0.0, %v598
  %600 = vdwg.mxu0
  %v601 = vmul.f32 %v278, %v562
  %v602 = vmul.f32 %v283, %v564
  %v603 = vmul.f32 %v288, %v567
  %v604 = vmul.f32 %v293, %v569
  %v605 = vmul.f32 %v298, %v572
  %v606 = vmul.f32 %v303, %v574
  %v607 = vmul.f32 %v308, %v577
  %v608 = vmul.f32 %v313, %v579
  %v609 = vmul.f32 %v318, %v582
  %v610 = vmul.f32 %v323, %v584
  %v611 = vmul.f32 %v328, %v587
  %v612 = vmul.f32 %v333, %v589
  %v613 = vmul.f32 %v338, %v592
  %v614 = vmul.f32 %v343, %v594
  %v615 = vmul.f32 %v348, %v597
  %v616 = vmul.f32 %v353, %v599
  %v617 = vpack.c.bf16 %v602, %v601
  %v618 = vpack.c.bf16 %v604, %v603
  %v619 = vpack.c.bf16 %v606, %v605
  %v620 = vpack.c.bf16 %v608, %v607
  %v621 = vpack.c.bf16 %v610, %v609
  %v622 = vpack.c.bf16 %v612, %v611
  %v623 = vpack.c.bf16 %v614, %v613
  %v624 = vpack.c.bf16 %v616, %v615
  %625 = vmatpush.bf16.msra.mxu0 %v624
  %626 = vmatpush.bf16.msra.mxu0 %v623
  %627 = vmatpush.bf16.msra.mxu0 %v622
  %628 = vmatpush.bf16.msra.mxu0 %v621
  %629 = vmatpush.bf16.msra.mxu0 %v620
  %630 = vmatpush.bf16.msra.mxu0 %v619
  %631 = vmatpush.bf16.msra.mxu0 %v618
  %632 = vmatpush.bf16.msra.mxu0 %v617
  %633 = vmatmul.bf16.gmra.mxu0 %v74
  %v634 = vpop.f32.mrf.mxu0
  %v635 = vadd.f32 0.0, %v634
  %v636 = vpop.f32.mrf.mxu0
  %v637 = vadd.f32 0.0, %v636
  %638 = vmatmul.bf16.gmra.mxu0 %v75
  %v639 = vpop.f32.mrf.mxu0
  %v640 = vadd.f32 0.0, %v639
  %v641 = vpop.f32.mrf.mxu0
  %v642 = vadd.f32 0.0, %v641
  %643 = vmatmul.bf16.gmra.mxu0 %v76
  %v644 = vpop.f32.mrf.mxu0
  %v645 = vadd.f32 0.0, %v644
  %v646 = vpop.f32.mrf.mxu0
  %v647 = vadd.f32 0.0, %v646
  %648 = vmatmul.bf16.gmra.mxu0 %v77
  %v649 = vpop.f32.mrf.mxu0
  %v650 = vadd.f32 0.0, %v649
  %v651 = vpop.f32.mrf.mxu0
  %v652 = vadd.f32 0.0, %v651
  %653 = vmatmul.bf16.gmra.mxu0 %v78
  %v654 = vpop.f32.mrf.mxu0
  %v655 = vadd.f32 0.0, %v654
  %v656 = vpop.f32.mrf.mxu0
  %v657 = vadd.f32 0.0, %v656
  %658 = vmatmul.bf16.gmra.mxu0 %v79
  %v659 = vpop.f32.mrf.mxu0
  %v660 = vadd.f32 0.0, %v659
  %v661 = vpop.f32.mrf.mxu0
  %v662 = vadd.f32 0.0, %v661
  %663 = vmatmul.bf16.gmra.mxu0 %v80
  %v664 = vpop.f32.mrf.mxu0
  %v665 = vadd.f32 0.0, %v664
  %v666 = vpop.f32.mrf.mxu0
  %v667 = vadd.f32 0.0, %v666
  %668 = vmatmul.bf16.gmra.mxu0 %v81
  %v669 = vpop.f32.mrf.mxu0
  %v670 = vadd.f32 0.0, %v669
  %v671 = vpop.f32.mrf.mxu0
  %v672 = vadd.f32 0.0, %v671
  %673 = vdwg.mxu0
  %v674 = vmul.f32 %v278, %v635
  %v675 = vmul.f32 %v283, %v637
  %v676 = vmul.f32 %v288, %v640
  %v677 = vmul.f32 %v293, %v642
  %v678 = vmul.f32 %v298, %v645
  %v679 = vmul.f32 %v303, %v647
  %v680 = vmul.f32 %v308, %v650
  %v681 = vmul.f32 %v313, %v652
  %v682 = vmul.f32 %v318, %v655
  %v683 = vmul.f32 %v323, %v657
  %v684 = vmul.f32 %v328, %v660
  %v685 = vmul.f32 %v333, %v662
  %v686 = vmul.f32 %v338, %v665
  %v687 = vmul.f32 %v343, %v667
  %v688 = vmul.f32 %v348, %v670
  %v689 = vmul.f32 %v353, %v672
  %v690 = vld [vmem:[%s6] sm:$0x1]
  %v692 = vperm.slane %v690, 0
  %v694 = vadd.f32 %v674, %v692
  %v695 = vadd.f32 %v675, %v692
  %v696 = vadd.f32 %v676, %v692
  %v697 = vadd.f32 %v677, %v692
  %v698 = vadd.f32 %v678, %v692
  %v699 = vadd.f32 %v679, %v692
  %v700 = vadd.f32 %v680, %v692
  %v701 = vadd.f32 %v681, %v692
  %v702 = vadd.f32 %v682, %v692
  %v703 = vadd.f32 %v683, %v692
  %v704 = vadd.f32 %v684, %v692
  %v705 = vadd.f32 %v685, %v692
  %v706 = vadd.f32 %v686, %v692
  %v707 = vadd.f32 %v687, %v692
  %v708 = vadd.f32 %v688, %v692
  %v709 = vadd.f32 %v689, %v692
  %710 = vst [vmem:[%s7] sm:$0xff] %v694
  %711 = vst [vmem:[%s7 + $0x8] sm:$0xff] %v695
  %712 = vst [vmem:[%s7 + $0x10] sm:$0xff] %v696
  %713 = vst [vmem:[%s7 + $0x18] sm:$0xff] %v697
  %714 = vst [vmem:[%s7 + $0x20] sm:$0xff] %v698
  %715 = vst [vmem:[%s7 + $0x28] sm:$0xff] %v699
  %716 = vst [vmem:[%s7 + $0x30] sm:$0xff] %v700
  %717 = vst [vmem:[%s7 + $0x38] sm:$0xff] %v701
  %718 = vst [vmem:[%s7 + $0x40] sm:$0xff] %v702
  %719 = vst [vmem:[%s7 + $0x48] sm:$0xff] %v703
  %720 = vst [vmem:[%s7 + $0x50] sm:$0xff] %v704
  %721 = vst [vmem:[%s7 + $0x58] sm:$0xff] %v705
  %722 = vst [vmem:[%s7 + $0x60] sm:$0xff] %v706
  %723 = vst [vmem:[%s7 + $0x68] sm:$0xff] %v707
  %724 = vst [vmem:[%s7 + $0x70] sm:$0xff] %v708
  %725 = vst [vmem:[%s7 + $0x78] sm:$0xff] %v709
  // Predicated region
  $region30: #{gcn_forward.1} parent=0 // pred_check
    _
  $region31: #{gcn_forward.1} parent=0 // pred_check_branch
    %727 = sbr.rel (0) target = $region33
  $region32: #{gcn_forward.1} parent=0 // pred_region
    _
  $region33: #{gcn_forward.1} parent=0 // pred_fallthru
    _
  // Predicated region
  $region34: #{gcn_forward.1} parent=0 // pred_check
    _
  $region35: #{gcn_forward.1} parent=0 // pred_check_branch
    %729 = sbr.rel (0) target = $region37
  $region36: #{gcn_forward.1} parent=0 // pred_region
    _
  $region37: #{gcn_forward.1} parent=0 // pred_fallthru
    _

</llo_original>
